<compile_context>
chip_gen: v7x
topology: tpu7x:2x2x1
jax: 0.10.0
libtpu: 0.0.40
codegen_flags: <defaults>
</compile_context>

<pallas_src>
import jax
import jax.numpy as jnp
from jax.experimental import pallas as pl
from jax.experimental.pallas import tpu as pltpu

LOG_STD_MAX = 2.0
LOG_STD_MIN = -20.0

_LANE = 128      # vreg lane width / MXU-friendly padding target
_SUBLANE = 8     # f32 sublane count


def _round_up(x, m):
    return ((x + m - 1) // m) * m


def _actor_kernel(s_ref, w1_ref, b1_ref, w2_ref, b2_ref, wh_ref, bh_ref,
                  lo_ref, hi_ref, out_ref):
    cdt = w1_ref.dtype  # compute dtype of the weights (f32 or bf16)
    # layer1 + ReLU (bias-add / ReLU stay in f32)
    h = jnp.dot(s_ref[...], w1_ref[...], preferred_element_type=jnp.float32)
    h = jnp.maximum(h + b1_ref[...], 0.0)
    # layer2 + ReLU
    h = jnp.dot(h.astype(cdt), w2_ref[...], preferred_element_type=jnp.float32)
    h = jnp.maximum(h + b2_ref[...], 0.0)
    # fused heads: lanes [0, action_dim) = mu, [action_dim, 2*action_dim) = log_sigma
    head = jnp.dot(h.astype(cdt), wh_ref[...], preferred_element_type=jnp.float32)
    head = head + bh_ref[...]
    # Per-lane clip bounds: ±inf on mu / dead lanes, [-20, 2] on log_sigma lanes.
    out_ref[...] = jnp.clip(head, lo_ref[...], hi_ref[...]).astype(out_ref.dtype)


def prepare_actor_params(params, *, compute_dtype=jnp.float32):
    """One-time padding / head fusion (hoisted out of the per-call hot path).

    params: dict with w1,b1,w2,b2,wmu,bmu,wls,bls (weights [in,out], biases [1,out])
    compute_dtype: jnp.float32 (exact) or jnp.bfloat16 (faster MXU on v6e/v7x,
        loosens the 1e-5 match vs the f32 reference).
    Returns (padded_param_dict, meta_dict).
    """
    state_dim, hidden = params["w1"].shape
    action_dim = params["wmu"].shape[1]
    hp = _round_up(hidden, _LANE)
    op = _round_up(2 * action_dim, _LANE)

    f32 = jnp.float32
    cdt = compute_dtype
    w1_p = jnp.zeros((state_dim, hp), cdt).at[:, :hidden].set(
        params["w1"].astype(cdt))
    b1_p = jnp.zeros((1, hp), f32).at[:, :hidden].set(params["b1"])
    w2_p = jnp.zeros((hp, hp), cdt).at[:hidden, :hidden].set(
        params["w2"].astype(cdt))
    b2_p = jnp.zeros((1, hp), f32).at[:, :hidden].set(params["b2"])
    # Fused head weight/bias: [hidden_pad, 2*action_dim padded to 128]
    wh_p = (jnp.zeros((hp, op), cdt)
            .at[:hidden, :action_dim].set(params["wmu"].astype(cdt))
            .at[:hidden, action_dim:2 * action_dim].set(params["wls"].astype(cdt)))
    bh_p = (jnp.zeros((1, op), f32)
            .at[:, :action_dim].set(params["bmu"])
            .at[:, action_dim:2 * action_dim].set(params["bls"]))
    # Precomputed clip bounds: pass-through (±inf) on mu / padded lanes,
    # [LOG_STD_MIN, LOG_STD_MAX] on the log_sigma lanes.
    lane = jnp.arange(op)
    is_ls = (lane >= action_dim) & (lane < 2 * action_dim)
    lo = jnp.where(is_ls, LOG_STD_MIN, -jnp.inf).astype(f32)[None, :]
    hi = jnp.where(is_ls, LOG_STD_MAX, jnp.inf).astype(f32)[None, :]

    padded = dict(w1=w1_p, b1=b1_p, w2=w2_p, b2=b2_p, wh=wh_p, bh=bh_p,
                  lo=lo, hi=hi)
    meta = dict(state_dim=state_dim, hidden=hidden, action_dim=action_dim,
                hp=hp, op=op)
    return padded, meta


def basic_actor_forward(s, padded_params, meta, *, tile_b=1024):
    """Run the BasicActor forward pass in a single Pallas kernel.

    s: [batch, state_dim]
    padded_params / meta: output of prepare_actor_params (padded once, reused).
    returns: (mu [batch, action_dim], log_sigma [batch, action_dim]) float32.
    """
    batch, sd_in = s.shape
    sd = meta["state_dim"]
    ad = meta["action_dim"]
    hp = meta["hp"]
    op = meta["op"]
    assert sd_in == sd, "state_dim mismatch between s and prepared params"
    p = padded_params
    cdt = p["w1"].dtype

    # Batch tiling: sublane-align the batch, cap the tile (default 1024 rows),
    # grid via cdiv so the remainder tile never rounds up to a full extra tile.
    b_pad = _round_up(batch, _SUBLANE)
    tb = min(_round_up(tile_b, _SUBLANE), b_pad)
    num_tiles = pl.cdiv(b_pad, tb)

    # Only per-call wrapper work: dtype cast (no-op for f32) + tiny sublane pad.
    s_in = s.astype(cdt)
    if b_pad != batch:
        s_in = jnp.pad(s_in, ((0, b_pad - batch), (0, 0)))

    # Resident weight blocks never change index; for big hidden widths single-
    # buffer them so a padded w2 doesn't double its footprint on v7x (64 MiB).
    wspec_kw = {}
    if hp >= 1024:
        wspec_kw = dict(pipeline_mode=pl.Buffered(1))

    # Rough VMEM estimate: double-buffered moving blocks (s, out) + weights.
    wbytes = jnp.dtype(cdt).itemsize
    moving = 2 * (tb * sd * jnp.dtype(s_in.dtype).itemsize + tb * op * 4)
    resident_mult = 1 if hp >= 1024 else 2
    resident = resident_mult * ((sd * hp + hp * hp + hp * op) * wbytes
                                + (2 * hp + 3 * op) * 4)
    est = moving + resident
    cp_kwargs = dict(dimension_semantics=("parallel",))
    if est > (30 << 20):
        cp_kwargs["vmem_limit_bytes"] = int(est * 1.25)
    # TODO(synk): on v7x, verify the batch axis shards across both TensorCores
    # with "parallel"; otherwise switch to pltpu.CORE_PARALLEL once batch >> tb.

    out = pl.pallas_call(
        _actor_kernel,
        out_shape=jax.ShapeDtypeStruct((b_pad, op), jnp.float32),
        grid_spec=pltpu.PrefetchScalarGridSpec(
            num_scalar_prefetch=0,
            grid=(num_tiles,),
            in_specs=[
                # batch-tiled input: real (unpadded) state_dim lanes
                pl.BlockSpec((tb, sd), lambda i: (i, 0)),
                # weights / biases / clip bounds: same block every iteration
                # -> VMEM resident, no re-DMA
                pl.BlockSpec((sd, hp), lambda i: (0, 0), **wspec_kw),
                pl.BlockSpec((1, hp), lambda i: (0, 0), **wspec_kw),
                pl.BlockSpec((hp, hp), lambda i: (0, 0), **wspec_kw),
                pl.BlockSpec((1, hp), lambda i: (0, 0), **wspec_kw),
                pl.BlockSpec((hp, op), lambda i: (0, 0), **wspec_kw),
                pl.BlockSpec((1, op), lambda i: (0, 0), **wspec_kw),
                pl.BlockSpec((1, op), lambda i: (0, 0), **wspec_kw),
                pl.BlockSpec((1, op), lambda i: (0, 0), **wspec_kw),
            ],
            out_specs=pl.BlockSpec((tb, op), lambda i: (i, 0)),
        ),
        compiler_params=pltpu.CompilerParams(**cp_kwargs),
    )(s_in, p["w1"], p["b1"], p["w2"], p["b2"], p["wh"], p["bh"],
      p["lo"], p["hi"])

    mu = out[:batch, :ad]
    log_sigma = out[:batch, ad:2 * ad]
    return mu, log_sigma


def init_params(key, state_dim, hidden_width, action_dim):
    """Deterministic synthetic init, PyTorch-Linear-like uniform(-1/sqrt(fan_in), +)."""
    def linear(k, fan_in, fan_out):
        kw, kb = jax.random.split(k)
        bound = 1.0 / jnp.sqrt(jnp.float32(fan_in))
        w = jax.random.uniform(kw, (fan_in, fan_out), jnp.float32, -bound, bound)
        b = jax.random.uniform(kb, (1, fan_out), jnp.float32, -bound, bound)
        return w, b

    k1, k2, k3, k4 = jax.random.split(key, 4)
    w1, b1 = linear(k1, state_dim, hidden_width)
    w2, b2 = linear(k2, hidden_width, hidden_width)
    wmu, bmu = linear(k3, hidden_width, action_dim)
    wls, bls = linear(k4, hidden_width, action_dim)
    return dict(w1=w1, b1=b1, w2=w2, b2=b2, wmu=wmu, bmu=bmu, wls=wls, bls=bls)


def _reference_forward(s, p):
    h1 = jnp.maximum(s @ p["w1"] + p["b1"], 0.0)
    h2 = jnp.maximum(h1 @ p["w2"] + p["b2"], 0.0)
    mu = h2 @ p["wmu"] + p["bmu"]
    ls = jnp.clip(h2 @ p["wls"] + p["bls"], LOG_STD_MIN, LOG_STD_MAX)
    return mu, ls


if __name__ == "__main__":
    # Small shapes consistent with the module: batch=2, state_dim=16,
    # hidden_width=32, action_dim=4.
    batch, state_dim, hidden_width, action_dim = 2, 16, 32, 4

    key = jax.random.PRNGKey(0)
    k_s, k_p = jax.random.split(key)
    s = jax.random.normal(k_s, (batch, state_dim), jnp.float32)
    params = init_params(k_p, state_dim, hidden_width, action_dim)

    # One-time padding/fusion (hoisted out of the per-call hot path).
    padded, meta = prepare_actor_params(params, compute_dtype=jnp.float32)
    # For v6e/v7x throughput: prepare_actor_params(params, compute_dtype=jnp.bfloat16)

    mu, log_sigma = basic_actor_forward(s, padded, meta)
    jax.block_until_ready((mu, log_sigma))

    # Correctness check against a pure-JAX reference of the same math.
    mu_ref, ls_ref = _reference_forward(s, params)
    assert mu.shape == (batch, action_dim) and log_sigma.shape == (batch, action_dim)
    assert jnp.allclose(mu, mu_ref, atol=1e-5, rtol=1e-5)
    assert jnp.allclose(log_sigma, ls_ref, atol=1e-5, rtol=1e-5)

    # TODO(synk): sample_policy (Normal rsample / tanh-squashed log-prob) is a
    # sampling routine outside forward(); not implemented in-kernel.
    print("KERNEL_OK")
</pallas_src>

<mosaic_0001>
module attributes {stable_mosaic.version = 11 : i64} {
  func.func @_actor_kernel(%arg0: i32, %arg1: memref<8x16xf32, #tpu.memory_space<vmem>>, %arg2: memref<16x128xf32, #tpu.memory_space<vmem>>, %arg3: memref<1x128xf32, #tpu.memory_space<vmem>>, %arg4: memref<128x128xf32, #tpu.memory_space<vmem>>, %arg5: memref<1x128xf32, #tpu.memory_space<vmem>>, %arg6: memref<128x128xf32, #tpu.memory_space<vmem>>, %arg7: memref<1x128xf32, #tpu.memory_space<vmem>>, %arg8: memref<1x128xf32, #tpu.memory_space<vmem>>, %arg9: memref<1x128xf32, #tpu.memory_space<vmem>>, %arg10: memref<8x128xf32, #tpu.memory_space<vmem>>) attributes {dimension_semantics = [#tpu.dimension_semantics<parallel>], iteration_bounds = array<i64: 1>, scalar_prefetch = 0 : i64, scratch_operands = 0 : i64, tpu.core_type = #tpu.core_type<tc>, window_params = [{transform_indices = @transform_0, window_bounds = array<i64: 8, 16>}, {pipeline_mode = #tpu.pipeline_mode<synchronous>, transform_indices = @transform_1, window_bounds = array<i64: 16, 128>}, {pipeline_mode = #tpu.pipeline_mode<synchronous>, transform_indices = @transform_2, window_bounds = array<i64: 1, 128>}, {pipeline_mode = #tpu.pipeline_mode<synchronous>, transform_indices = @transform_3, window_bounds = array<i64: 128, 128>}, {pipeline_mode = #tpu.pipeline_mode<synchronous>, transform_indices = @transform_4, window_bounds = array<i64: 1, 128>}, {pipeline_mode = #tpu.pipeline_mode<synchronous>, transform_indices = @transform_5, window_bounds = array<i64: 128, 128>}, {pipeline_mode = #tpu.pipeline_mode<synchronous>, transform_indices = @transform_6, window_bounds = array<i64: 1, 128>}, {pipeline_mode = #tpu.pipeline_mode<synchronous>, transform_indices = @transform_7, window_bounds = array<i64: 1, 128>}, {pipeline_mode = #tpu.pipeline_mode<synchronous>, transform_indices = @transform_8, window_bounds = array<i64: 1, 128>}, {transform_indices = @transform_9, window_bounds = array<i64: 8, 128>}]} {
    %c0 = arith.constant 0 : index
    %c0_0 = arith.constant 0 : index
    %0 = vector.load %arg1[%c0, %c0_0] : memref<8x16xf32, #tpu.memory_space<vmem>>, vector<8x16xf32>
    %c0_1 = arith.constant 0 : index
    %c0_2 = arith.constant 0 : index
    %1 = vector.load %arg2[%c0_1, %c0_2] : memref<16x128xf32, #tpu.memory_space<vmem>>, vector<16x128xf32>
    %cst = arith.constant dense<0.000000e+00> : vector<8x128xf32>
    %2 = tpu.matmul %0, %1, %cst {dimension_numbers = #tpu.dot_dimension_numbers<[1], [0], [0], [1], [0, 0, 1, 1], [], []>} : vector<8x16xf32>, vector<16x128xf32>, vector<8x128xf32> -> vector<8x128xf32>
    %c0_3 = arith.constant 0 : index
    %c0_4 = arith.constant 0 : index
    %3 = vector.load %arg3[%c0_3, %c0_4] : memref<1x128xf32, #tpu.memory_space<vmem>>, vector<1x128xf32>
    %4 = vector.broadcast %3 : vector<1x128xf32> to vector<8x128xf32>
    %5 = arith.addf %2, %4 : vector<8x128xf32>
    %cst_5 = arith.constant 0.000000e+00 : f32
    %6 = vector.broadcast %cst_5 : f32 to vector<8x128xf32>
    %7 = arith.maximumf %5, %6 : vector<8x128xf32>
    %c0_6 = arith.constant 0 : index
    %c0_7 = arith.constant 0 : index
    %8 = vector.load %arg4[%c0_6, %c0_7] : memref<128x128xf32, #tpu.memory_space<vmem>>, vector<128x128xf32>
    %cst_8 = arith.constant dense<0.000000e+00> : vector<8x128xf32>
    %9 = tpu.matmul %7, %8, %cst_8 {dimension_numbers = #tpu.dot_dimension_numbers<[1], [0], [0], [1], [0, 0, 1, 1], [], []>} : vector<8x128xf32>, vector<128x128xf32>, vector<8x128xf32> -> vector<8x128xf32>
    %c0_9 = arith.constant 0 : index
    %c0_10 = arith.constant 0 : index
    %10 = vector.load %arg5[%c0_9, %c0_10] : memref<1x128xf32, #tpu.memory_space<vmem>>, vector<1x128xf32>
    %11 = vector.broadcast %10 : vector<1x128xf32> to vector<8x128xf32>
    %12 = arith.addf %9, %11 : vector<8x128xf32>
    %cst_11 = arith.constant 0.000000e+00 : f32
    %13 = vector.broadcast %cst_11 : f32 to vector<8x128xf32>
    %14 = arith.maximumf %12, %13 : vector<8x128xf32>
    %c0_12 = arith.constant 0 : index
    %c0_13 = arith.constant 0 : index
    %15 = vector.load %arg6[%c0_12, %c0_13] : memref<128x128xf32, #tpu.memory_space<vmem>>, vector<128x128xf32>
    %cst_14 = arith.constant dense<0.000000e+00> : vector<8x128xf32>
    %16 = tpu.matmul %14, %15, %cst_14 {dimension_numbers = #tpu.dot_dimension_numbers<[1], [0], [0], [1], [0, 0, 1, 1], [], []>} : vector<8x128xf32>, vector<128x128xf32>, vector<8x128xf32> -> vector<8x128xf32>
    %c0_15 = arith.constant 0 : index
    %c0_16 = arith.constant 0 : index
    %17 = vector.load %arg7[%c0_15, %c0_16] : memref<1x128xf32, #tpu.memory_space<vmem>>, vector<1x128xf32>
    %18 = vector.broadcast %17 : vector<1x128xf32> to vector<8x128xf32>
    %19 = arith.addf %16, %18 : vector<8x128xf32>
    %c0_17 = arith.constant 0 : index
    %c0_18 = arith.constant 0 : index
    %20 = vector.load %arg8[%c0_17, %c0_18] : memref<1x128xf32, #tpu.memory_space<vmem>>, vector<1x128xf32>
    %c0_19 = arith.constant 0 : index
    %c0_20 = arith.constant 0 : index
    %21 = vector.load %arg9[%c0_19, %c0_20] : memref<1x128xf32, #tpu.memory_space<vmem>>, vector<1x128xf32>
    %22 = vector.broadcast %20 : vector<1x128xf32> to vector<8x128xf32>
    %23 = arith.maximumf %22, %19 : vector<8x128xf32>
    %24 = vector.broadcast %21 : vector<1x128xf32> to vector<8x128xf32>
    %25 = arith.minimumf %24, %23 : vector<8x128xf32>
    %c0_21 = arith.constant 0 : index
    %c0_22 = arith.constant 0 : index
    %26 = vector.load %arg10[%c0_21, %c0_22] : memref<8x128xf32, #tpu.memory_space<vmem>>, vector<8x128xf32>
    tpu.vector_store %arg10[%c0_21, %c0_22], %25 {strides = array<i32>} : memref<8x128xf32, #tpu.memory_space<vmem>>, vector<8x128xf32>,
    return
  }
  func.func @transform_0(%arg0: i32) -> (i32, i32) {
    %c0_i32 = arith.constant 0 : i32
    %c0_i32_0 = arith.constant 0 : i32
    return %arg0, %c0_i32 : i32, i32
  }
  func.func @transform_1(%arg0: i32) -> (i32, i32) {
    %c0_i32 = arith.constant 0 : i32
    %c0_i32_0 = arith.constant 0 : i32
    %c0_i32_1 = arith.constant 0 : i32
    return %c0_i32, %c0_i32_0 : i32, i32
  }
  func.func @transform_2(%arg0: i32) -> (i32, i32) {
    %c0_i32 = arith.constant 0 : i32
    %c0_i32_0 = arith.constant 0 : i32
    %c0_i32_1 = arith.constant 0 : i32
    return %c0_i32, %c0_i32_0 : i32, i32
  }
  func.func @transform_3(%arg0: i32) -> (i32, i32) {
    %c0_i32 = arith.constant 0 : i32
    %c0_i32_0 = arith.constant 0 : i32
    %c0_i32_1 = arith.constant 0 : i32
    return %c0_i32, %c0_i32_0 : i32, i32
  }
  func.func @transform_4(%arg0: i32) -> (i32, i32) {
    %c0_i32 = arith.constant 0 : i32
    %c0_i32_0 = arith.constant 0 : i32
    %c0_i32_1 = arith.constant 0 : i32
    return %c0_i32, %c0_i32_0 : i32, i32
  }
  func.func @transform_5(%arg0: i32) -> (i32, i32) {
    %c0_i32 = arith.constant 0 : i32
    %c0_i32_0 = arith.constant 0 : i32
    %c0_i32_1 = arith.constant 0 : i32
    return %c0_i32, %c0_i32_0 : i32, i32
  }
  func.func @transform_6(%arg0: i32) -> (i32, i32) {
    %c0_i32 = arith.constant 0 : i32
    %c0_i32_0 = arith.constant 0 : i32
    %c0_i32_1 = arith.constant 0 : i32
    return %c0_i32, %c0_i32_0 : i32, i32
  }
  func.func @transform_7(%arg0: i32) -> (i32, i32) {
    %c0_i32 = arith.constant 0 : i32
    %c0_i32_0 = arith.constant 0 : i32
    %c0_i32_1 = arith.constant 0 : i32
    return %c0_i32, %c0_i32_0 : i32, i32
  }
  func.func @transform_8(%arg0: i32) -> (i32, i32) {
    %c0_i32 = arith.constant 0 : i32
    %c0_i32_0 = arith.constant 0 : i32
    %c0_i32_1 = arith.constant 0 : i32
    return %c0_i32, %c0_i32_0 : i32, i32
  }
  func.func @transform_9(%arg0: i32) -> (i32, i32) {
    %c0_i32 = arith.constant 0 : i32
    %c0_i32_0 = arith.constant 0 : i32
    return %arg0, %c0_i32 : i32, i32
  }
}

</mosaic_0001>

<llo_original>
// kernel: tpu_custom_call.1
$region0: #{tpu_custom_call.1}
  #allocation0 [shape = 'u32[]', space=smem, size = 0x4, offset = 0x4, fixed_abs, tag = 'smem constant byte address 0x4 - core index']
  #allocation1 [shape = 'u32[144,128]{1,0:T(1,128)}', space=vmem, size = 0x12000, scoped, tag = 'internal scratch']
  %s0 = inlined_call_operand.hbm [shape: f32[8,16], index: 0, kind: input, shape index: {}]
  %s1 = inlined_call_operand.hbm [shape: f32[16,128], index: 1, kind: input, shape index: {}]
  %s2 = inlined_call_operand.vmem [shape: f32[1,128], index: 2, kind: input, shape index: {}]
  %s3 = inlined_call_operand.hbm [shape: f32[128,128], index: 3, kind: input, shape index: {}]
  %s4 = inlined_call_operand.vmem [shape: f32[1,128], index: 4, kind: input, shape index: {}]
  %s5 = inlined_call_operand.hbm [shape: f32[128,128], index: 5, kind: input, shape index: {}]
  %s6 = inlined_call_operand.vmem [shape: f32[1,128], index: 6, kind: input, shape index: {}]
  %s7 = inlined_call_operand.vmem [shape: f32[1,128], index: 7, kind: input, shape index: {}]
  %s8 = inlined_call_operand.vmem [shape: f32[1,128], index: 8, kind: input, shape index: {}]
  %s9 = inlined_call_operand.hbm [shape: f32[8,128], index: 9, kind: output, shape index: {}]
  %s10 = sld [smem:[#allocation0]]
  $region62: #{tpu_custom_call.1} parent=0
    _
  %s12 = ssub.s32 1, %s10
  %s13 = scalar_select 0, %s12, %s10
  $region1: #{tpu_custom_call.1} parent=0
    #allocation2 [shape = 'u8[4096]{0}', space=vmem, size = 0x1000, scoped, tag = 'input window, operand 0, single buffered']
    #allocation3 [shape = 's32[1]{0}', space=sflag, size = 0x4, scoped, tag = 'scoped memory for tpu_custom_call.1']
    #allocation4 [shape = 's32[1]{0}', space=sflag, size = 0x4, scoped, tag = 'scoped memory for tpu_custom_call.1']
    #allocation5 [shape = 'u8[8192]{0}', space=vmem, size = 0x2000, scoped, tag = 'input window, operand 1, single buffered']
    #allocation6 [shape = 's32[1]{0}', space=sflag, size = 0x4, scoped, tag = 'scoped memory for tpu_custom_call.1']
    #allocation7 [shape = 'u8[65536]{0}', space=vmem, size = 0x10000, scoped, tag = 'input window, operand 3, single buffered']
    #allocation8 [shape = 'u8[65536]{0}', space=vmem, size = 0x10000, scoped, tag = 'input window, operand 5, single buffered']
    #allocation9 [shape = 's32[1]{0}', space=sflag, size = 0x4, scoped, tag = 'scoped memory for tpu_custom_call.1']
    #allocation10 [shape = 'u8[4096]{0}', space=vmem, size = 0x1000, scoped, tag = 'output window, operand 0, single buffered']
    %14 = vsyncpa [#allocation3], 0
    %15 = vsyncpa [#allocation6], 0
    %16 = vsyncpa [#allocation9], 0
    %17 = vsyncpa [#allocation4], 0
    // Predicated region
    $region2: #{tpu_custom_call.1} parent=1 // pred_check
      _
    $region3: #{tpu_custom_call.1} parent=1 // pred_check_branch
      %19 = sbr.rel (0) target = $region5
    $region4: #{tpu_custom_call.1} parent=1 // pred_region
      %s21 = ssub.s32 128, 128
      %22 = vsyncadd [#allocation3], %s21
      %s24 = sshll.u32 [#allocation2], 4
      %s25 = int_to_ptr.vmem [resolvable:$true] %s24
      %27 = dma.hbm_to_vmem [thread:$0]  %s0, 128, %s25, [#allocation3]
    $region5: #{tpu_custom_call.1} parent=1 // pred_fallthru
      _
    // Predicated region
    $region6: #{tpu_custom_call.1} parent=1 // pred_check
      _
    $region7: #{tpu_custom_call.1} parent=1 // pred_check_branch
      %29 = sbr.rel (0) target = $region9
    $region8: #{tpu_custom_call.1} parent=1 // pred_region
      %s31 = ssub.s32 256, 256
      %32 = vsyncadd [#allocation6], %s31
      %s33 = sshll.u32 [#allocation5], 4
      %s34 = int_to_ptr.vmem [resolvable:$true] %s33
      %39 = dma.hbm_to_vmem [thread:$0]  %s1, 256, %s34, [#allocation6], 128, 128, 8
    $region9: #{tpu_custom_call.1} parent=1 // pred_fallthru
      _
    // Predicated region
    $region10: #{tpu_custom_call.1} parent=1 // pred_check
      _
    $region11: #{tpu_custom_call.1} parent=1 // pred_check_branch
      %41 = sbr.rel (0) target = $region13
    $region12: #{tpu_custom_call.1} parent=1 // pred_region
      _
    $region13: #{tpu_custom_call.1} parent=1 // pred_fallthru
      _
    // Predicated region
    $region14: #{tpu_custom_call.1} parent=1 // pred_check
      _
    $region15: #{tpu_custom_call.1} parent=1 // pred_check_branch
      %43 = sbr.rel (0) target = $region17
    $region16: #{tpu_custom_call.1} parent=1 // pred_region
      %s45 = ssub.s32 2048, 2048
      %46 = vsyncadd [#allocation6], %s45
      %s47 = sshll.u32 [#allocation7], 4
      %s48 = int_to_ptr.vmem [resolvable:$true] %s47
      %53 = dma.hbm_to_vmem [thread:$0]  %s3, 2048, %s48, [#allocation6], 128, 128, 8
    $region17: #{tpu_custom_call.1} parent=1 // pred_fallthru
      _
    // Predicated region
    $region18: #{tpu_custom_call.1} parent=1 // pred_check
      _
    $region19: #{tpu_custom_call.1} parent=1 // pred_check_branch
      %55 = sbr.rel (0) target = $region21
    $region20: #{tpu_custom_call.1} parent=1 // pred_region
      _
    $region21: #{tpu_custom_call.1} parent=1 // pred_fallthru
      _
    // Predicated region
    $region22: #{tpu_custom_call.1} parent=1 // pred_check
      _
    $region23: #{tpu_custom_call.1} parent=1 // pred_check_branch
      %57 = sbr.rel (0) target = $region25
    $region24: #{tpu_custom_call.1} parent=1 // pred_region
      %s59 = ssub.s32 2048, 2048
      %60 = vsyncadd [#allocation9], %s59
      %s61 = sshll.u32 [#allocation8], 4
      %s62 = int_to_ptr.vmem [resolvable:$true] %s61
      %67 = dma.hbm_to_vmem [thread:$0]  %s5, 2048, %s62, [#allocation9], 128, 128, 8
    $region25: #{tpu_custom_call.1} parent=1 // pred_fallthru
      _
    // Predicated region
    $region26: #{tpu_custom_call.1} parent=1 // pred_check
      _
    $region27: #{tpu_custom_call.1} parent=1 // pred_check_branch
      %69 = sbr.rel (0) target = $region29
    $region28: #{tpu_custom_call.1} parent=1 // pred_region
      _
    $region29: #{tpu_custom_call.1} parent=1 // pred_fallthru
      _
    // Predicated region
    $region30: #{tpu_custom_call.1} parent=1 // pred_check
      _
    $region31: #{tpu_custom_call.1} parent=1 // pred_check_branch
      %71 = sbr.rel (0) target = $region33
    $region32: #{tpu_custom_call.1} parent=1 // pred_region
      _
    $region33: #{tpu_custom_call.1} parent=1 // pred_fallthru
      _
    // Predicated region
    $region34: #{tpu_custom_call.1} parent=1 // pred_check
      _
    $region35: #{tpu_custom_call.1} parent=1 // pred_check_branch
      %73 = sbr.rel (0) target = $region37
    $region36: #{tpu_custom_call.1} parent=1 // pred_region
      _
    $region37: #{tpu_custom_call.1} parent=1 // pred_fallthru
      _
    // Predicated region
    $region38: #{tpu_custom_call.1} parent=1 // pred_check
      _
    $region39: #{tpu_custom_call.1} parent=1 // pred_check_branch
      %75 = sbr.rel (0) target = $region41
    $region40: #{tpu_custom_call.1} parent=1 // pred_region
      %76 = dma.done [#allocation3], 128
    $region41: #{tpu_custom_call.1} parent=1 // pred_fallthru
      _
    // Predicated region
    $region42: #{tpu_custom_call.1} parent=1 // pred_check
      _
    $region43: #{tpu_custom_call.1} parent=1 // pred_check_branch
      %78 = sbr.rel (0) target = $region45
    $region44: #{tpu_custom_call.1} parent=1 // pred_region
      %79 = dma.done [#allocation6], 256
    $region45: #{tpu_custom_call.1} parent=1 // pred_fallthru
      _
    // Predicated region
    $region46: #{tpu_custom_call.1} parent=1 // pred_check
      _
    $region47: #{tpu_custom_call.1} parent=1 // pred_check_branch
      %81 = sbr.rel (0) target = $region49
    $region48: #{tpu_custom_call.1} parent=1 // pred_region
      %82 = dma.done [#allocation6], 2048
    $region49: #{tpu_custom_call.1} parent=1 // pred_fallthru
      _
    // Predicated region
    $region50: #{tpu_custom_call.1} parent=1 // pred_check
      _
    $region51: #{tpu_custom_call.1} parent=1 // pred_check_branch
      %84 = sbr.rel (0) target = $region53
    $region52: #{tpu_custom_call.1} parent=1 // pred_region
      %85 = dma.done [#allocation9], 2048
    $region53: #{tpu_custom_call.1} parent=1 // pred_fallthru
      _
    %v86 = vld [vmem:[#allocation2] sm:$0xff]
    %v87 = vld [vmem:[#allocation5] sm:$0xff]
    %v88 = vld [vmem:[#allocation5 + $0x8] sm:$0xff]
    %v89 = vld [vmem:[%s2] sm:$0x1]
    %v91 = vlaneseq
    %v92 = vshrl.u32 %v91, 7
    %v93 = vsub.s32 0, %v92
    %v94 = vrot.slane %v89, %v93
    %vm96 = vcmask 130048
    %v98 = vsel %vm96, %v86, 0
    %100 = vmatprep.subr.mxu0 0.0
    %101 = vmatpush1.msra.mxu0 %v87
    %102 = vmatprep.subr.mxu0 0.0
    %103 = vmatpush1.msra.mxu0 %v88
    %104 = vmatprep.subr.mxu0 0.0
    %105 = vmatpush1.msra.mxu0 0.0
    %106 = vmatprep.subr.mxu0 0.0
    %107 = vmatpush1.msra.mxu0 0.0
    %108 = vmatprep.subr.mxu0 0.0
    %109 = vmatpush1.msra.mxu0 0.0
    %110 = vmatprep.subr.mxu0 0.0
    %111 = vmatpush1.msra.mxu0 0.0
    %112 = vmatprep.subr.mxu0 0.0
    %113 = vmatpush1.msra.mxu0 0.0
    %114 = vmatprep.subr.mxu0 0.0
    %115 = vmatpush1.msra.mxu0 0.0
    %116 = vmatprep.subr.mxu0 0.0
    %117 = vmatpush1.msra.mxu0 0.0
    %118 = vmatprep.subr.mxu0 0.0
    %119 = vmatpush1.msra.mxu0 0.0
    %120 = vmatprep.subr.mxu0 0.0
    %121 = vmatpush1.msra.mxu0 0.0
    %122 = vmatprep.subr.mxu0 0.0
    %123 = vmatpush1.msra.mxu0 0.0
    %124 = vmatprep.subr.mxu0 0.0
    %125 = vmatpush1.msra.mxu0 0.0
    %126 = vmatprep.subr.mxu0 0.0
    %127 = vmatpush1.msra.mxu0 0.0
    %128 = vmatprep.subr.mxu0 0.0
    %129 = vmatpush1.msra.mxu0 0.0
    %130 = vmatprep.subr.mxu0 0.0
    %131 = vmatpush1.msra.mxu0 0.0
    %132 = vmatprep.subr.mxu0 0.0
    %133 = vmatpush1.msra.mxu0 0.0
    %134 = vmatprep.subr.mxu0 0.0
    %135 = vmatpush1.msra.mxu0 0.0
    %136 = vmatprep.subr.mxu0 0.0
    %137 = vmatpush1.msra.mxu0 0.0
    %138 = vmatprep.subr.mxu0 0.0
    %139 = vmatpush1.msra.mxu0 0.0
    %140 = vmatprep.subr.mxu0 0.0
    %141 = vmatpush1.msra.mxu0 0.0
    %142 = vmatprep.subr.mxu0 0.0
    %143 = vmatpush1.msra.mxu0 0.0
    %144 = vmatprep.subr.mxu0 0.0
    %145 = vmatpush1.msra.mxu0 0.0
    %146 = vmatprep.subr.mxu0 0.0
    %147 = vmatpush1.msra.mxu0 0.0
    %148 = vmatprep.subr.mxu0 0.0
    %149 = vmatpush1.msra.mxu0 0.0
    %150 = vmatprep.subr.mxu0 0.0
    %151 = vmatpush1.msra.mxu0 0.0
    %152 = vmatprep.subr.mxu0 0.0
    %153 = vmatpush1.msra.mxu0 0.0
    %154 = vmatprep.subr.mxu0 0.0
    %155 = vmatpush1.msra.mxu0 0.0
    %156 = vmatprep.subr.mxu0 0.0
    %157 = vmatpush1.msra.mxu0 0.0
    %158 = vmatprep.subr.mxu0 0.0
    %159 = vmatpush1.msra.mxu0 0.0
    %160 = vmatprep.subr.mxu0 0.0
    %161 = vmatpush1.msra.mxu0 0.0
    %162 = vmatprep.subr.mxu0 0.0
    %163 = vmatpush1.msra.mxu0 0.0
    %164 = vmatprep.mubr.f32.mxu0 0.0
    %165 = vmatmul.mubr.f32.gmra.mrb[0].mxu0 %v98
    %v166 = vpop.f32.mrb[0].mxu0
    %v167 = vadd.f32 %v94, %v166
    %v168 = vpop.f32.mrb[0].mxu0
    %169 = vdwg.mxu0
    %v170 = vmax.f32 %v167, 0.0
    %v171 = vld [vmem:[#allocation7] sm:$0xff]
    %v172 = vld [vmem:[#allocation7 + $0x8] sm:$0xff]
    %v173 = vld [vmem:[#allocation7 + $0x10] sm:$0xff]
    %v174 = vld [vmem:[#allocation7 + $0x18] sm:$0xff]
    %v175 = vld [vmem:[#allocation7 + $0x20] sm:$0xff]
    %v176 = vld [vmem:[#allocation7 + $0x28] sm:$0xff]
    %v177 = vld [vmem:[#allocation7 + $0x30] sm:$0xff]
    %v178 = vld [vmem:[#allocation7 + $0x38] sm:$0xff]
    %v179 = vld [vmem:[#allocation7 + $0x40] sm:$0xff]
    %v180 = vld [vmem:[#allocation7 + $0x48] sm:$0xff]
    %v181 = vld [vmem:[#allocation7 + $0x50] sm:$0xff]
    %v182 = vld [vmem:[#allocation7 + $0x58] sm:$0xff]
    %v183 = vld [vmem:[#allocation7 + $0x60] sm:$0xff]
    %v184 = vld [vmem:[#allocation7 + $0x68] sm:$0xff]
    %v185 = vld [vmem:[#allocation7 + $0x70] sm:$0xff]
    %v186 = vld [vmem:[#allocation7 + $0x78] sm:$0xff]
    %v187 = vld [vmem:[%s4] sm:$0x1]
    %v189 = vlaneseq
    %v190 = vshrl.u32 %v189, 7
    %v191 = vsub.s32 0, %v190
    %v192 = vrot.slane %v187, %v191
    %194 = vmatprep.subr.mxu0 0.0
    %195 = vmatpush1.msra.mxu0 %v171
    %196 = vmatprep.subr.mxu0 0.0
    %197 = vmatpush1.msra.mxu0 %v172
    %198 = vmatprep.subr.mxu0 0.0
    %199 = vmatpush1.msra.mxu0 %v173
    %200 = vmatprep.subr.mxu0 0.0
    %201 = vmatpush1.msra.mxu0 %v174
    %202 = vmatprep.subr.mxu0 0.0
    %203 = vmatpush1.msra.mxu0 %v175
    %204 = vmatprep.subr.mxu0 0.0
    %205 = vmatpush1.msra.mxu0 %v176
    %206 = vmatprep.subr.mxu0 0.0
    %207 = vmatpush1.msra.mxu0 %v177
    %208 = vmatprep.subr.mxu0 0.0
    %209 = vmatpush1.msra.mxu0 %v178
    %210 = vmatprep.subr.mxu0 0.0
    %211 = vmatpush1.msra.mxu0 %v179
    %212 = vmatprep.subr.mxu0 0.0
    %213 = vmatpush1.msra.mxu0 %v180
    %214 = vmatprep.subr.mxu0 0.0
    %215 = vmatpush1.msra.mxu0 %v181
    %216 = vmatprep.subr.mxu0 0.0
    %217 = vmatpush1.msra.mxu0 %v182
    %218 = vmatprep.subr.mxu0 0.0
    %219 = vmatpush1.msra.mxu0 %v183
    %220 = vmatprep.subr.mxu0 0.0
    %221 = vmatpush1.msra.mxu0 %v184
    %222 = vmatprep.subr.mxu0 0.0
    %223 = vmatpush1.msra.mxu0 %v185
    %224 = vmatprep.subr.mxu0 0.0
    %225 = vmatpush1.msra.mxu0 %v186
    %226 = vmatprep.subr.mxu0 0.0
    %227 = vmatpush1.msra.mxu0 0.0
    %228 = vmatprep.subr.mxu0 0.0
    %229 = vmatpush1.msra.mxu0 0.0
    %230 = vmatprep.subr.mxu0 0.0
    %231 = vmatpush1.msra.mxu0 0.0
    %232 = vmatprep.subr.mxu0 0.0
    %233 = vmatpush1.msra.mxu0 0.0
    %234 = vmatprep.subr.mxu0 0.0
    %235 = vmatpush1.msra.mxu0 0.0
    %236 = vmatprep.subr.mxu0 0.0
    %237 = vmatpush1.msra.mxu0 0.0
    %238 = vmatprep.subr.mxu0 0.0
    %239 = vmatpush1.msra.mxu0 0.0
    %240 = vmatprep.subr.mxu0 0.0
    %241 = vmatpush1.msra.mxu0 0.0
    %242 = vmatprep.subr.mxu0 0.0
    %243 = vmatpush1.msra.mxu0 0.0
    %244 = vmatprep.subr.mxu0 0.0
    %245 = vmatpush1.msra.mxu0 0.0
    %246 = vmatprep.subr.mxu0 0.0
    %247 = vmatpush1.msra.mxu0 0.0
    %248 = vmatprep.subr.mxu0 0.0
    %249 = vmatpush1.msra.mxu0 0.0
    %250 = vmatprep.subr.mxu0 0.0
    %251 = vmatpush1.msra.mxu0 0.0
    %252 = vmatprep.subr.mxu0 0.0
    %253 = vmatpush1.msra.mxu0 0.0
    %254 = vmatprep.subr.mxu0 0.0
    %255 = vmatpush1.msra.mxu0 0.0
    %256 = vmatprep.subr.mxu0 0.0
    %257 = vmatpush1.msra.mxu0 0.0
    %258 = vmatprep.mubr.f32.mxu0 0.0
    %259 = vmatmul.mubr.f32.gmra.mrb[0].mxu0 %v170
    %v260 = vpop.f32.mrb[0].mxu0
    %v261 = vadd.f32 %v192, %v260
    %v262 = vpop.f32.mrb[0].mxu0
    %263 = vdwg.mxu0
    %v264 = vmax.f32 %v261, 0.0
    %v265 = vld [vmem:[#allocation8] sm:$0xff]
    %v266 = vld [vmem:[#allocation8 + $0x8] sm:$0xff]
    %v267 = vld [vmem:[#allocation8 + $0x10] sm:$0xff]
    %v268 = vld [vmem:[#allocation8 + $0x18] sm:$0xff]
    %v269 = vld [vmem:[#allocation8 + $0x20] sm:$0xff]
    %v270 = vld [vmem:[#allocation8 + $0x28] sm:$0xff]
    %v271 = vld [vmem:[#allocation8 + $0x30] sm:$0xff]
    %v272 = vld [vmem:[#allocation8 + $0x38] sm:$0xff]
    %v273 = vld [vmem:[#allocation8 + $0x40] sm:$0xff]
    %v274 = vld [vmem:[#allocation8 + $0x48] sm:$0xff]
    %v275 = vld [vmem:[#allocation8 + $0x50] sm:$0xff]
    %v276 = vld [vmem:[#allocation8 + $0x58] sm:$0xff]
    %v277 = vld [vmem:[#allocation8 + $0x60] sm:$0xff]
    %v278 = vld [vmem:[#allocation8 + $0x68] sm:$0xff]
    %v279 = vld [vmem:[#allocation8 + $0x70] sm:$0xff]
    %v280 = vld [vmem:[#allocation8 + $0x78] sm:$0xff]
    %v281 = vld [vmem:[%s6] sm:$0x1]
    %v283 = vlaneseq
    %v284 = vshrl.u32 %v283, 7
    %v285 = vsub.s32 0, %v284
    %v286 = vrot.slane %v281, %v285
    %288 = vmatprep.subr.mxu0 0.0
    %289 = vmatpush1.msra.mxu0 %v265
    %290 = vmatprep.subr.mxu0 0.0
    %291 = vmatpush1.msra.mxu0 %v266
    %292 = vmatprep.subr.mxu0 0.0
    %293 = vmatpush1.msra.mxu0 %v267
    %294 = vmatprep.subr.mxu0 0.0
    %295 = vmatpush1.msra.mxu0 %v268
    %296 = vmatprep.subr.mxu0 0.0
    %297 = vmatpush1.msra.mxu0 %v269
    %298 = vmatprep.subr.mxu0 0.0
    %299 = vmatpush1.msra.mxu0 %v270
    %300 = vmatprep.subr.mxu0 0.0
    %301 = vmatpush1.msra.mxu0 %v271
    %302 = vmatprep.subr.mxu0 0.0
    %303 = vmatpush1.msra.mxu0 %v272
    %304 = vmatprep.subr.mxu0 0.0
    %305 = vmatpush1.msra.mxu0 %v273
    %306 = vmatprep.subr.mxu0 0.0
    %307 = vmatpush1.msra.mxu0 %v274
    %308 = vmatprep.subr.mxu0 0.0
    %309 = vmatpush1.msra.mxu0 %v275
    %310 = vmatprep.subr.mxu0 0.0
    %311 = vmatpush1.msra.mxu0 %v276
    %312 = vmatprep.subr.mxu0 0.0
    %313 = vmatpush1.msra.mxu0 %v277
    %314 = vmatprep.subr.mxu0 0.0
    %315 = vmatpush1.msra.mxu0 %v278
    %316 = vmatprep.subr.mxu0 0.0
    %317 = vmatpush1.msra.mxu0 %v279
    %318 = vmatprep.subr.mxu0 0.0
    %319 = vmatpush1.msra.mxu0 %v280
    %320 = vmatprep.subr.mxu0 0.0
    %321 = vmatpush1.msra.mxu0 0.0
    %322 = vmatprep.subr.mxu0 0.0
    %323 = vmatpush1.msra.mxu0 0.0
    %324 = vmatprep.subr.mxu0 0.0
    %325 = vmatpush1.msra.mxu0 0.0
    %326 = vmatprep.subr.mxu0 0.0
    %327 = vmatpush1.msra.mxu0 0.0
    %328 = vmatprep.subr.mxu0 0.0
    %329 = vmatpush1.msra.mxu0 0.0
    %330 = vmatprep.subr.mxu0 0.0
    %331 = vmatpush1.msra.mxu0 0.0
    %332 = vmatprep.subr.mxu0 0.0
    %333 = vmatpush1.msra.mxu0 0.0
    %334 = vmatprep.subr.mxu0 0.0
    %335 = vmatpush1.msra.mxu0 0.0
    %336 = vmatprep.subr.mxu0 0.0
    %337 = vmatpush1.msra.mxu0 0.0
    %338 = vmatprep.subr.mxu0 0.0
    %339 = vmatpush1.msra.mxu0 0.0
    %340 = vmatprep.subr.mxu0 0.0
    %341 = vmatpush1.msra.mxu0 0.0
    %342 = vmatprep.subr.mxu0 0.0
    %343 = vmatpush1.msra.mxu0 0.0
    %344 = vmatprep.subr.mxu0 0.0
    %345 = vmatpush1.msra.mxu0 0.0
    %346 = vmatprep.subr.mxu0 0.0
    %347 = vmatpush1.msra.mxu0 0.0
    %348 = vmatprep.subr.mxu0 0.0
    %349 = vmatpush1.msra.mxu0 0.0
    %350 = vmatprep.subr.mxu0 0.0
    %351 = vmatpush1.msra.mxu0 0.0
    %352 = vmatprep.mubr.f32.mxu0 0.0
    %353 = vmatmul.mubr.f32.gmra.mrb[0].mxu0 %v264
    %v354 = vpop.f32.mrb[0].mxu0
    %v355 = vadd.f32 %v286, %v354
    %v356 = vpop.f32.mrb[0].mxu0
    %357 = vdwg.mxu0
    %v358 = vld [vmem:[%s7] sm:$0x1]
    %v359 = vld [vmem:[%s8] sm:$0x1]
    %v361 = vlaneseq
    %v362 = vshrl.u32 %v361, 7
    %v363 = vsub.s32 0, %v362
    %v364 = vrot.slane %v358, %v363
    %v366 = vmax.f32 %v364, %v355
    %v368 = vlaneseq
    %v369 = vshrl.u32 %v368, 7
    %v370 = vsub.s32 0, %v369
    %v371 = vrot.slane %v359, %v370
    %v373 = vmin.f32 %v371, %v366
    %374 = vst [vmem:[#allocation10] sm:$0xff] %v373
    // Predicated region
    $region54: #{tpu_custom_call.1} parent=1 // pred_check
      _
    $region55: #{tpu_custom_call.1} parent=1 // pred_check_branch
      %376 = sbr.rel (0) target = $region57
    $region56: #{tpu_custom_call.1} parent=1 // pred_region
      %s378 = ssub.s32 128, 128
      %379 = vsyncadd [#allocation4], %s378
      %s381 = sshll.u32 [#allocation10], 4
      %s382 = int_to_ptr.vmem [resolvable:$true] %s381
      %384 = dma.vmem_to_hbm [thread:$0]  %s382, 128, %s9, [#allocation4]
    $region57: #{tpu_custom_call.1} parent=1 // pred_fallthru
      _
    // Predicated region
    $region58: #{tpu_custom_call.1} parent=1 // pred_check
      _
    $region59: #{tpu_custom_call.1} parent=1 // pred_check_branch
      %386 = sbr.rel (0) target = $region61
    $region60: #{tpu_custom_call.1} parent=1 // pred_region
      %387 = dma.done [#allocation4], 128
    $region61: #{tpu_custom_call.1} parent=1 // pred_fallthru
      _
    %388 = vsyncpa [#allocation3], 1
    %389 = vsyncpa [#allocation6], 1
    %390 = vsyncpa [#allocation9], 1
    %391 = vsyncpa [#allocation4], 1

</llo_original>
